<compile_context>
chip_gen: v7x
topology: tpu7x:2x2x1
jax: 0.10.0
libtpu: 0.0.40
codegen_flags: <defaults>
</compile_context>

<pallas_src>
import jax
import jax.numpy as jnp
from jax.experimental import pallas as pl
from jax.experimental.pallas import tpu as pltpu


# ----------------------------- small utilities -------------------------------
def _vmem_limit_bytes():
    """Per-generation scoped-VMEM budget: ~75% of physical, capped at 96 MiB.
    v5e/v6e (128 MiB physical) -> 96 MiB, v7x (64 MiB) -> 48 MiB."""
    try:
        cap = pltpu.get_tpu_info().vmem_capacity_bytes
        return int(min(96 * 1024 * 1024, max(32 * 1024 * 1024, (cap * 3) // 4)))
    except Exception:
        return 48 * 1024 * 1024


def _pick_tile(total, preferred, align=1, prefer_multi=False):
    """Largest aligned divisor of `total` that is <= `preferred`.

    Never returns more than `preferred` (an oddly-shaped `total` cannot silently
    blow the VMEM budget); relaxes alignment (align -> 8 -> 1) before giving up.
    With prefer_multi, avoids a 1-step grid so both v7x TCs get work."""
    def best(pref, a):
        for c in range(min(pref, total), 0, -1):
            if total % c == 0 and c % a == 0:
                return c
        return None

    for a in (align, 8, 1):
        t = best(preferred, a)
        if t is None:
            continue
        if prefer_multi and total // t < 2:
            t2 = best(max(total // 2, 1), a)
            if t2 is not None:
                t = t2
        return t
    return 1


# --------------------- fused projection / head kernel ------------------------
def _make_proj_kernel(n_parts, apply_relu):
    def kernel(*refs):
        # refs = (x_part_0, ..., x_part_{P-1}, w, b, out)
        x_refs = refs[:n_parts]
        w_ref, b_ref, o_ref = refs[n_parts], refs[n_parts + 1], refs[n_parts + 2]
        acc = jnp.zeros(o_ref.shape, jnp.float32)
        for p in range(n_parts):                        # static, P in {1, 2}
            acc = acc + jnp.dot(x_refs[p][...], w_ref[p],
                                preferred_element_type=jnp.float32)
        acc = acc + b_ref[...]
        if apply_relu:
            acc = jnp.maximum(acc, 0.0)
        o_ref[...] = acc.astype(o_ref.dtype)
    return kernel


def fused_projection(x_parts, w, b, *, apply_relu, out_dtype, tile_n=512):
    """y[n] = sum_p x_parts[p][n] @ w[p] + b  (optionally ReLU).  Row-tiled.

    x_parts: tuple of (N, D) bf16 arrays.  w: (P, D, G) bf16.  b: (1, G) f32.
    """
    n_parts = len(x_parts)
    N, D = x_parts[0].shape
    G = w.shape[-1]
    tn = _pick_tile(N, tile_n, align=16, prefer_multi=True)

    in_specs = [pl.BlockSpec((tn, xp.shape[1]), lambda i: (i, 0)) for xp in x_parts]
    # Constant-index weights: single-buffer so they don't cost 2x VMEM.
    in_specs.append(pl.BlockSpec((n_parts, D, G), lambda i: (0, 0, 0),
                                 pipeline_mode=pl.Buffered(1)))
    in_specs.append(pl.BlockSpec((1, G), lambda i: (0, 0)))

    return pl.pallas_call(
        _make_proj_kernel(n_parts, apply_relu),
        out_shape=jax.ShapeDtypeStruct((N, G), out_dtype),
        grid_spec=pltpu.PrefetchScalarGridSpec(
            num_scalar_prefetch=0,
            grid=(N // tn,),
            in_specs=in_specs,
            out_specs=pl.BlockSpec((tn, G), lambda i: (i, 0)),
        ),
        compiler_params=pltpu.CompilerParams(
            dimension_semantics=("parallel",),
            vmem_limit_bytes=_vmem_limit_bytes(),
        ),
    )(*x_parts, w, b)


# --------------------------- LSTM recurrence kernel --------------------------
def _lstm_recurrence_kernel(xg_f_ref, xg_b_ref, w_hh_ref, out_f_ref, out_b_ref,
                            h_sc, c_sc):
    """One grid step = t_chunk timesteps of BOTH directions.

    xg_f_ref : (tc, B, 4H) bf16  forward  gates (x@W_ih+b) for time chunk c
    xg_b_ref : (tc, B, 4H) bf16  backward gates for time chunk C-1-c
    w_hh_ref : (2, H, 4H)  bf16  hidden->gate weights (fwd, bwd)
    out_f/b  : (tc, B, H)  bf16  hidden states of the corresponding chunk
    h_sc     : (2, B, H)   bf16  cross-chunk hidden state (fwd, bwd)
    c_sc     : (2, B, H)   f32   cross-chunk cell state   (fwd, bwd)
    """
    c_idx = pl.program_id(0)
    tc = xg_f_ref.shape[0]
    H = out_f_ref.shape[-1]

    @pl.when(c_idx == 0)
    def _():
        h_sc[...] = jnp.zeros_like(h_sc)
        c_sc[...] = jnp.zeros_like(c_sc)

    w_f = w_hh_ref[0]                    # resident (single-buffered) weights
    w_b = w_hh_ref[1]

    def cell(gates, c_prev):
        # PyTorch gate order: i, f, g, o.  H=896 in production is 128-aligned,
        # so these are dense lane slices there; at small demo H the masked
        # selects are cheap.
        i_g = jax.nn.sigmoid(gates[:, 0 * H:1 * H])
        f_g = jax.nn.sigmoid(gates[:, 1 * H:2 * H])
        g_g = jnp.tanh(gates[:, 2 * H:3 * H])
        o_g = jax.nn.sigmoid(gates[:, 3 * H:4 * H])
        c_new = f_g * c_prev + i_g * g_g
        h_new = (o_g * jnp.tanh(c_new)).astype(jnp.bfloat16)
        return h_new, c_new

    def step(j, carry):
        # h/c are loop-carried values (vreg-resident): no per-step VMEM traffic
        # on the serial dependency chain.
        h_f, c_f, h_b, c_b = carry
        jr = tc - 1 - j                  # backward walks its (reversed) chunk
        g_f = xg_f_ref[j] + jnp.dot(h_f, w_f, preferred_element_type=jnp.float32)
        g_b = xg_b_ref[jr] + jnp.dot(h_b, w_b, preferred_element_type=jnp.float32)
        h_f, c_f = cell(g_f, c_f)
        h_b, c_b = cell(g_b, c_b)
        out_f_ref[j] = h_f
        out_b_ref[jr] = h_b
        return h_f, c_f, h_b, c_b

    init = (h_sc[0], c_sc[0], h_sc[1], c_sc[1])
    unroll = tc if tc <= 16 else 8       # cap unroll to avoid vreg spills
    h_f, c_f, h_b, c_b = jax.lax.fori_loop(0, tc, step, init, unroll=unroll)

    # Persist state across chunks (one write per chunk, not per timestep).
    h_sc[0] = h_f
    c_sc[0] = c_f
    h_sc[1] = h_b
    c_sc[1] = c_b


def lstm_recurrence(xg, w_hh, hidden, *, t_chunk=64):
    """Run both directions' recurrences in one pallas_call, grid over chunks.

    xg: (T, B, 8H) bf16, lanes = [fwd i,f,g,o | bwd i,f,g,o].
    Returns (out_fwd, out_bwd), each (T, B, hidden) bf16 in original time order.
    """
    T, B, G2 = xg.shape
    H = hidden
    assert G2 == 8 * H
    tc = _pick_tile(T, t_chunk, align=1)
    C = T // tc

    return pl.pallas_call(
        _lstm_recurrence_kernel,
        out_shape=(jax.ShapeDtypeStruct((T, B, H), jnp.bfloat16),
                   jax.ShapeDtypeStruct((T, B, H), jnp.bfloat16)),
        grid_spec=pltpu.PrefetchScalarGridSpec(
            num_scalar_prefetch=0,
            grid=(C,),
            in_specs=[
                # forward: chunk c, forward lane half
                pl.BlockSpec((tc, B, 4 * H), lambda c: (c, 0, 0)),
                # backward: chunk C-1-c, backward lane half
                pl.BlockSpec((tc, B, 4 * H), lambda c: (C - 1 - c, 0, 1)),
                # recurrent weights: resident, single-buffered
                pl.BlockSpec((2, H, 4 * H), lambda c: (0, 0, 0),
                             pipeline_mode=pl.Buffered(1)),
            ],
            out_specs=(
                pl.BlockSpec((tc, B, H), lambda c: (c, 0, 0)),
                pl.BlockSpec((tc, B, H), lambda c: (C - 1 - c, 0, 0)),
            ),
            scratch_shapes=[
                pltpu.VMEM((2, B, H), jnp.bfloat16),   # h state (fwd, bwd)
                pltpu.VMEM((2, B, H), jnp.float32),    # c state (fwd, bwd)
            ],
        ),
        compiler_params=pltpu.CompilerParams(
            dimension_semantics=("arbitrary",),        # chunks are sequential
            vmem_limit_bytes=_vmem_limit_bytes(),
        ),
    )(xg, xg, w_hh)                                    # same array, two lane halves


# ----------------------------- Parameters & forward --------------------------
def init_params(key, n_fft, hidden, num_layers, num_spks):
    """Deterministic synthetic parameters (pre-transposed / fused layouts).

    lstm[l] = (w_ih: (P, Din_part, 8H) bf16,   # gate cols: [fwd ifgo | bwd ifgo]
               w_hh: (2, H, 4H)        bf16,
               b   : (1, 8H)           f32)    # b_ih + b_hh, both directions
    head    = (w: (2, H, G_pad) bf16, b: (1, G_pad) f32), G_pad = ceil128(S*n_fft)
    """
    params = {"lstm": [], "head": None}
    scale = 0.1
    H = hidden
    for layer in range(num_layers):
        p_parts = 1 if layer == 0 else 2          # layer 0 input = n_fft; else fwd|bwd H
        d_part = n_fft if layer == 0 else H
        key, k1, k2, k3 = jax.random.split(key, 4)
        w_ih = (scale * jax.random.normal(k1, (p_parts, d_part, 8 * H),
                                          jnp.float32)).astype(jnp.bfloat16)
        w_hh = (scale * jax.random.normal(k2, (2, H, 4 * H),
                                          jnp.float32)).astype(jnp.bfloat16)
        b = scale * jax.random.normal(k3, (1, 8 * H), jnp.float32)
        params["lstm"].append((w_ih, w_hh, b))
    G = num_spks * n_fft
    G_pad = ((G + 127) // 128) * 128
    key, k1, k2 = jax.random.split(key, 3)
    w_head = (scale * jax.random.normal(k1, (2, H, G), jnp.float32)).astype(jnp.bfloat16)
    b_head = scale * jax.random.normal(k2, (1, G), jnp.float32)
    # Lane-pad the fused head so the widest store in the network is 128-dense.
    w_head = jnp.pad(w_head, ((0, 0), (0, 0), (0, G_pad - G)))
    b_head = jnp.pad(b_head, ((0, 0), (0, G_pad - G)))
    params["head"] = (w_head, b_head)
    return params


def pitnet_forward(params, x, hidden, num_spks, n_fft, *, t_chunk=64, tile_n=512):
    """model_type=0 forward.  x: (B, T, n_fft) float32 (batch-first, like PyTorch)."""
    B, T, F = x.shape
    N = T * B
    # Single layout change at the start: batch-first -> t-major rows, bf16 acts.
    xt = jnp.transpose(x, (1, 0, 2)).astype(jnp.bfloat16)          # (T, B, F)
    parts = (xt.reshape(N, F),)
    for (w_ih, w_hh, b) in params["lstm"]:
        # (a) input->gate projection for both directions, one lane-dense matmul;
        #     xg kept in bf16 to halve the HBM traffic the recurrence re-reads.
        xg = fused_projection(parts, w_ih, b, apply_relu=False,
                              out_dtype=jnp.bfloat16, tile_n=tile_n)  # (N, 8H)
        # (b) both directions' recurrences in one pallas_call (grid over chunks)
        out_f, out_b = lstm_recurrence(xg.reshape(T, B, 8 * hidden), w_hh, hidden,
                                       t_chunk=t_chunk)               # 2 x (T,B,H)
        parts = (out_f.reshape(N, hidden), out_b.reshape(N, hidden))  # free reshapes
    # dropout(p=0.0) is identity.  Fused speaker heads: one matmul + ReLU.
    w_head, b_head = params["head"]
    y = fused_projection(parts, w_head, b_head, apply_relu=True,
                         out_dtype=jnp.float32, tile_n=tile_n)        # (N, G_pad)
    G = num_spks * n_fft
    y = y[:, :G].reshape(T, B, num_spks, n_fft).transpose(1, 0, 2, 3)  # (B,T,S,F)
    return [y[:, :, s, :] for s in range(num_spks)]                    # list of masks


# ----------------------------- pure-JAX reference ----------------------------
def pitnet_reference(params, x, hidden, num_spks, n_fft):
    """f32 reference of the same math (same bf16 weights, f32 activations)."""
    B, T, _ = x.shape
    h = x.astype(jnp.float32)                                    # (B, T, D)

    def run_dir(xg_d, w_hh_d, reverse):
        def step(carry, g_row):
            hh, cc = carry
            gates = g_row + hh @ w_hh_d
            i = jax.nn.sigmoid(gates[:, 0 * hidden:1 * hidden])
            f = jax.nn.sigmoid(gates[:, 1 * hidden:2 * hidden])
            g = jnp.tanh(gates[:, 2 * hidden:3 * hidden])
            o = jax.nn.sigmoid(gates[:, 3 * hidden:4 * hidden])
            cc = f * cc + i * g
            hh = o * jnp.tanh(cc)
            return (hh, cc), hh
        xs = jnp.transpose(xg_d, (1, 0, 2))                      # (T, B, 4H)
        if reverse:
            xs = xs[::-1]
        init = (jnp.zeros((B, hidden), jnp.float32), jnp.zeros((B, hidden), jnp.float32))
        _, hs = jax.lax.scan(step, init, xs)                     # (T, B, H)
        if reverse:
            hs = hs[::-1]
        return jnp.transpose(hs, (1, 0, 2))                      # (B, T, H)

    for (w_ih, w_hh, b) in params["lstm"]:
        w_ih = w_ih.astype(jnp.float32)
        w_hh = w_hh.astype(jnp.float32)
        if w_ih.shape[0] == 1:
            xg = jnp.einsum('btd,dg->btg', h, w_ih[0]) + b[0]
        else:
            xg = (jnp.einsum('btd,dg->btg', h[..., :hidden], w_ih[0]) +
                  jnp.einsum('btd,dg->btg', h[..., hidden:], w_ih[1]) + b[0])
        h_f = run_dir(xg[..., :4 * hidden], w_hh[0], False)
        h_b = run_dir(xg[..., 4 * hidden:], w_hh[1], True)
        h = jnp.concatenate([h_f, h_b], axis=-1)
    w_head, b_head = params["head"]
    y = (jnp.einsum('bth,hg->btg', h[..., :hidden], w_head[0].astype(jnp.float32)) +
         jnp.einsum('bth,hg->btg', h[..., hidden:], w_head[1].astype(jnp.float32)) +
         b_head[0])
    G = num_spks * n_fft
    y = jnp.maximum(y[..., :G], 0.0)
    return [y[..., s * n_fft:(s + 1) * n_fft] for s in range(num_spks)]


# ----------------------------- Main -------------------------------------------
if __name__ == "__main__":
    # Small shapes consistent with the module (n_fft plays the feature dim role).
    B, T = 2, 16
    N_FFT = 32
    HIDDEN = 32
    NUM_LAYERS = 3
    NUM_SPKS = 2

    key = jax.random.PRNGKey(0)
    key, kx = jax.random.split(key)
    params = init_params(key, N_FFT, HIDDEN, NUM_LAYERS, NUM_SPKS)
    x = jax.random.normal(kx, (B, T, N_FFT), jnp.float32)

    # t_chunk=8 -> 2 chunks (exercises cross-chunk state carry);
    # tile_n=16 -> 2 row tiles in the projection/head kernels.
    masks = pitnet_forward(params, x, HIDDEN, NUM_SPKS, N_FFT, t_chunk=8, tile_n=16)
    masks = jax.block_until_ready(masks)

    ref = pitnet_reference(params, x, HIDDEN, NUM_SPKS, N_FFT)

    assert len(masks) == NUM_SPKS
    for m, r in zip(masks, ref):
        assert m.shape == (B, T, N_FFT), m.shape
        assert bool(jnp.all(jnp.isfinite(m)))
        assert bool(jnp.all(m >= 0.0))          # ReLU output
        err = float(jnp.max(jnp.abs(m - r)))
        assert err < 0.05, f"max abs err vs reference: {err}"

    # TODO(synk): model_type 1/3/4 conv front-end (dilated Conv2d+BN stack) not
    # implemented; model_type=0 (default constructor) path only.
    print("KERNEL_OK")
</pallas_src>

<mosaic_0001>
module attributes {stable_mosaic.version = 11 : i64} {
  func.func @kernel(%arg0: i32, %arg1: memref<16x32xbf16, #tpu.memory_space<vmem>>, %arg2: memref<1x32x256xbf16, #tpu.memory_space<vmem>>, %arg3: memref<1x256xf32, #tpu.memory_space<vmem>>, %arg4: memref<16x256xbf16, #tpu.memory_space<vmem>>) attributes {dimension_semantics = [#tpu.dimension_semantics<parallel>], iteration_bounds = array<i64: 2>, scalar_prefetch = 0 : i64, scratch_operands = 0 : i64, tpu.core_type = #tpu.core_type<tc>, window_params = [{transform_indices = @transform_0, window_bounds = array<i64: 16, 32>}, {pipeline_mode = #tpu.pipeline_mode<synchronous>, transform_indices = @transform_1, window_bounds = array<i64: 1, 32, 256>}, {pipeline_mode = #tpu.pipeline_mode<synchronous>, transform_indices = @transform_2, window_bounds = array<i64: 1, 256>}, {transform_indices = @transform_3, window_bounds = array<i64: 16, 256>}]} {
    %cst = arith.constant 0.000000e+00 : f32
    %0 = vector.broadcast %cst : f32 to vector<16x256xf32>
    %c0 = arith.constant 0 : index
    %c0_0 = arith.constant 0 : index
    %1 = vector.load %arg1[%c0, %c0_0] : memref<16x32xbf16, #tpu.memory_space<vmem>>, vector<16x32xbf16>
    %c0_1 = arith.constant 0 : index
    %c0_2 = arith.constant 0 : index
    %c0_3 = arith.constant 0 : index
    %2 = vector.load %arg2[%c0_1, %c0_2, %c0_3] : memref<1x32x256xbf16, #tpu.memory_space<vmem>>, vector<1x32x256xbf16>
    %3 = vector.shape_cast %2 : vector<1x32x256xbf16> to vector<32x256xbf16>
    %cst_4 = arith.constant dense<0.000000e+00> : vector<16x256xf32>
    %4 = tpu.matmul %1, %3, %cst_4 {dimension_numbers = #tpu.dot_dimension_numbers<[1], [0], [0], [1], [0, 0, 1, 1], [], []>} : vector<16x32xbf16>, vector<32x256xbf16>, vector<16x256xf32> -> vector<16x256xf32>
    %5 = arith.addf %0, %4 : vector<16x256xf32>
    %c0_5 = arith.constant 0 : index
    %c0_6 = arith.constant 0 : index
    %6 = vector.load %arg3[%c0_5, %c0_6] : memref<1x256xf32, #tpu.memory_space<vmem>>, vector<1x256xf32>
    %7 = vector.broadcast %6 : vector<1x256xf32> to vector<16x256xf32>
    %8 = arith.addf %5, %7 : vector<16x256xf32>
    %9 = arith.truncf %8 : vector<16x256xf32> to vector<16x256xbf16>
    %c0_7 = arith.constant 0 : index
    %c0_8 = arith.constant 0 : index
    %10 = vector.load %arg4[%c0_7, %c0_8] : memref<16x256xbf16, #tpu.memory_space<vmem>>, vector<16x256xbf16>
    tpu.vector_store %arg4[%c0_7, %c0_8], %9 {strides = array<i32>} : memref<16x256xbf16, #tpu.memory_space<vmem>>, vector<16x256xbf16>,
    return
  }
  func.func @transform_0(%arg0: i32) -> (i32, i32) {
    %c0_i32 = arith.constant 0 : i32
    %c0_i32_0 = arith.constant 0 : i32
    return %arg0, %c0_i32 : i32, i32
  }
  func.func @transform_1(%arg0: i32) -> (i32, i32, i32) {
    %c0_i32 = arith.constant 0 : i32
    %c0_i32_0 = arith.constant 0 : i32
    %c0_i32_1 = arith.constant 0 : i32
    %c0_i32_2 = arith.constant 0 : i32
    return %c0_i32, %c0_i32_0, %c0_i32_1 : i32, i32, i32
  }
  func.func @transform_2(%arg0: i32) -> (i32, i32) {
    %c0_i32 = arith.constant 0 : i32
    %c0_i32_0 = arith.constant 0 : i32
    %c0_i32_1 = arith.constant 0 : i32
    return %c0_i32, %c0_i32_0 : i32, i32
  }
  func.func @transform_3(%arg0: i32) -> (i32, i32) {
    %c0_i32 = arith.constant 0 : i32
    %c0_i32_0 = arith.constant 0 : i32
    return %arg0, %c0_i32 : i32, i32
  }
}

</mosaic_0001>

<llo_original>
// kernel: tpu_custom_call.1
$region0: #{tpu_custom_call.1}
  #allocation0 [shape = 'u32[]', space=smem, size = 0x4, offset = 0x4, fixed_abs, tag = 'smem constant byte address 0x4 - core index']
  #allocation1 [shape = 'u32[144,128]{1,0:T(1,128)}', space=vmem, size = 0x12000, scoped, tag = 'internal scratch']
  %s0 = inlined_call_operand.hbm [shape: bf16[32,32], index: 0, kind: input, shape index: {}]
  %s1 = inlined_call_operand.hbm [shape: bf16[1,32,256], index: 1, kind: input, shape index: {}]
  %s2 = inlined_call_operand.vmem [shape: f32[1,256], index: 2, kind: input, shape index: {}]
  %s3 = inlined_call_operand.hbm [shape: bf16[32,256], index: 3, kind: output, shape index: {}]
  %s4 = sld [smem:[#allocation0]]
  $region53: #{tpu_custom_call.1} parent=0
    _
  %s6 = ssub.s32 1, %s4
  %s7 = scalar_select 0, %s6, %s4
  $region1: #{tpu_custom_call.1} parent=0
    #allocation2 [shape = 'u8[8192]{0}', space=vmem, size = 0x2000, scoped, tag = 'input window, operand 0']
    #allocation3 [shape = 's32[2]{0}', space=sflag, size = 0x8, scoped, tag = 'scoped memory for tpu_custom_call.1']
    #allocation4 [shape = 's32[2]{0}', space=sflag, size = 0x8, scoped, tag = 'scoped memory for tpu_custom_call.1']
    #allocation5 [shape = 'u8[16384]{0}', space=vmem, size = 0x4000, scoped, tag = 'input window, operand 1, single buffered']
    #allocation6 [shape = 's32[1]{0}', space=sflag, size = 0x4, scoped, tag = 'scoped memory for tpu_custom_call.1']
    #allocation7 [shape = 'u8[16384]{0}', space=vmem, size = 0x4000, scoped, tag = 'output window, operand 0']
    %8 = vsyncpa [#allocation3], 0
    %s9 = scalar_lea.sflag [#allocation3], 1
    %10 = vsyncpa %s9, 0
    %11 = vsyncpa [#allocation6], 0
    %12 = vsyncpa [#allocation4], 0
    %s13 = scalar_lea.sflag [#allocation4], 1
    %14 = vsyncpa %s13, 0
    loop: start=0, step=1, limit=4
    $region2: #{tpu_custom_call.1} parent=1 // loop_pre_header
      _
    $region3: #{tpu_custom_call.1} parent=1 // loop_header
      %s16 = sphi 0, %s20
      %p17 = scmp.ge.s32.totalorder %s16, 4
      %s26 = sphi 0, %s28
      %s29 = sphi 0, %s26
      %s30 = sphi 0, %s29
      %s46 = sphi 0, %s30
      %s50 = sphi 0, %s50
      %s52 = sphi 0, %s50
      %s53 = sphi 0, %s52
      %s67 = sphi 0, %s53
      %s71 = sphi 0, %s71
      %s73 = sphi 0, %s71
      %s74 = sphi 0, %s73
      %s88 = sphi 0, %s74
      %s94 = sphi 0, %s96
      %s97 = sphi 0, %s94
      %s98 = sphi 0, %s97
      %s114 = sphi 0, %s98
    $region4: #{tpu_custom_call.1} parent=1 // loop_header_branch
      %19 = sbr.rel (%p17) target = $region8
    $region5: #{tpu_custom_call.1} parent=1 // loop_body
      %s21 = ssub.s32 %s16, 1
      %s22 = ssub.s32 %s16, 2
      %s23 = sadd.s32 %s16, 1
      %s24 = ssub.s32 %s16, %s23
      %p25 = scmp.eq.s32.totalorder %s24, 0
      %s27 = sadd.s32 %s26, 1
      %s28 = scalar_select %p25, %s26, %s27
      %p31 = pneg %p25
      %p32 = scmp.eq.s32.totalorder %s16, 1
      %p33 = por %p31, %p32
      %p34 = scmp.ne.s32.totalorder %s26, %s29
      %p35 = scmp.eq.s32.totalorder %s16, 0
      %p36 = por %p34, %p35
      %p37 = scmp.ne.s32.totalorder %s26, %s29
      %p38 = scmp.eq.s32.totalorder %s21, 1
      %p39 = por %p37, %p38
      %p40 = scmp.ne.s32.totalorder %s29, %s30
      %p41 = scmp.eq.s32.totalorder %s21, 0
      %p42 = por %p40, %p41
      %p43 = scmp.ne.s32.totalorder %s29, %s30
      %p44 = scmp.eq.s32.totalorder %s22, 1
      %p45 = por %p43, %p44
      %p47 = scmp.ne.s32.totalorder %s30, %s46
      %p48 = scmp.eq.s32.totalorder %s22, 0
      %p49 = por %p47, %p48
      %s51 = sadd.s32 %s50, 1
      %p54 = scmp.eq.s32.totalorder %s16, 1
      %p55 = scmp.ne.s32.totalorder %s50, %s52
      %p56 = scmp.eq.s32.totalorder %s16, 0
      %p57 = por %p55, %p56
      %p58 = scmp.ne.s32.totalorder %s50, %s52
      %p59 = scmp.eq.s32.totalorder %s21, 1
      %p60 = por %p58, %p59
      %p61 = scmp.ne.s32.totalorder %s52, %s53
      %p62 = scmp.eq.s32.totalorder %s21, 0
      %p63 = por %p61, %p62
      %p64 = scmp.ne.s32.totalorder %s52, %s53
      %p65 = scmp.eq.s32.totalorder %s22, 1
      %p66 = por %p64, %p65
      %p68 = scmp.ne.s32.totalorder %s53, %s67
      %p69 = scmp.eq.s32.totalorder %s22, 0
      %p70 = por %p68, %p69
      %s72 = sadd.s32 %s71, 1
      %p75 = scmp.eq.s32.totalorder %s16, 1
      %p76 = scmp.ne.s32.totalorder %s71, %s73
      %p77 = scmp.eq.s32.totalorder %s16, 0
      %p78 = por %p76, %p77
      %p79 = scmp.ne.s32.totalorder %s71, %s73
      %p80 = scmp.eq.s32.totalorder %s21, 1
      %p81 = por %p79, %p80
      %p82 = scmp.ne.s32.totalorder %s73, %s74
      %p83 = scmp.eq.s32.totalorder %s21, 0
      %p84 = por %p82, %p83
      %p85 = scmp.ne.s32.totalorder %s73, %s74
      %p86 = scmp.eq.s32.totalorder %s22, 1
      %p87 = por %p85, %p86
      %p89 = scmp.ne.s32.totalorder %s74, %s88
      %p90 = scmp.eq.s32.totalorder %s22, 0
      %p91 = por %p89, %p90
      %s92 = ssub.s32 %s16, %s23
      %p93 = scmp.eq.s32.totalorder %s92, 0
      %s95 = sadd.s32 %s94, 1
      %s96 = scalar_select %p93, %s94, %s95
      %p99 = pneg %p93
      %p100 = scmp.eq.s32.totalorder %s16, 1
      %p101 = por %p99, %p100
      %p102 = scmp.ne.s32.totalorder %s94, %s97
      %p103 = scmp.eq.s32.totalorder %s16, 0
      %p104 = por %p102, %p103
      %p105 = scmp.ne.s32.totalorder %s94, %s97
      %p106 = scmp.eq.s32.totalorder %s21, 1
      %p107 = por %p105, %p106
      %p108 = scmp.ne.s32.totalorder %s97, %s98
      %p109 = scmp.eq.s32.totalorder %s21, 0
      %p110 = por %p108, %p109
      %p111 = scmp.ne.s32.totalorder %s97, %s98
      %p112 = scmp.eq.s32.totalorder %s22, 1
      %p113 = por %p111, %p112
      %p115 = scmp.ne.s32.totalorder %s98, %s114
      %p116 = scmp.eq.s32.totalorder %s22, 0
      %p117 = por %p115, %p116
      %p118 = scmp.le.s32.totalorder 1, %s16
      %p119 = scmp.lt.s32.totalorder %s16, 3
      %p120 = pnand %p118, %p119
      %p121 = pneg %p120
      // Predicated region
      $region9: #{tpu_custom_call.1} parent=5 // pred_check
        _
      $region10: #{tpu_custom_call.1} parent=5 // pred_check_branch
        %123 = sbr.rel (%p120) target = $region12
      $region11: #{tpu_custom_call.1} parent=5 // pred_region
        %s124 = ssub.s32 %s16, 1
        // Predicated region
        $region13: #{tpu_custom_call.1} parent=11 // pred_check
          %p125 = pneg %p63
        $region14: #{tpu_custom_call.1} parent=11 // pred_check_branch
          %127 = sbr.rel (%p125) target = $region16
        $region15: #{tpu_custom_call.1} parent=11 // pred_region
          %s129 = ssub.s32 512, 512
          %130 = vsyncadd [#allocation6], %s129
          %s131 = sshll.u32 [#allocation5], 4
          %s132 = int_to_ptr.vmem [resolvable:$true] %s131
          %137 = dma.hbm_to_vmem [thread:$0]  %s1, 512, %s132, [#allocation6], 128, 128, 8
        $region16: #{tpu_custom_call.1} parent=11 // pred_fallthru
          _
        // Predicated region
        $region17: #{tpu_custom_call.1} parent=11 // pred_check
          %p138 = pneg %p84
        $region18: #{tpu_custom_call.1} parent=11 // pred_check_branch
          %140 = sbr.rel (%p138) target = $region20
        $region19: #{tpu_custom_call.1} parent=11 // pred_region
          _
        $region20: #{tpu_custom_call.1} parent=11 // pred_fallthru
          _
      $region12: #{tpu_custom_call.1} parent=5 // pred_fallthru
        _
      %p141 = scmp.lt.s32.totalorder %s16, 2
      // Predicated region
      $region21: #{tpu_custom_call.1} parent=5 // pred_check
        %p142 = pneg %p141
      $region22: #{tpu_custom_call.1} parent=5 // pred_check_branch
        %144 = sbr.rel (%p142) target = $region24
      $region23: #{tpu_custom_call.1} parent=5 // pred_region
        // Predicated region
        $region25: #{tpu_custom_call.1} parent=23 // pred_check
          %p145 = pneg %p36
        $region26: #{tpu_custom_call.1} parent=23 // pred_check_branch
          %147 = sbr.rel (%p145) target = $region28
        $region27: #{tpu_custom_call.1} parent=23 // pred_region
          %s148 = sand.u32 %s26, 1
          %s149 = scalar_lea.sflag [#allocation3], %s148
          %s150 = sand.u32 %s26, 1
          %s151 = smul.addr %s150, 8
          %s152 = scalar_lea.vmem [#allocation2], %s151
          %s153 = smul.u32 2, %s16
          %s155 = ssub.s32 128, 128
          %156 = vsyncadd %s149, %s155
          %s157 = smul.addr %s153, 64
          %s158 = scalar_lea.hbm %s0, %s157
          %s159 = sshll.u32 %s152, 4
          %s160 = int_to_ptr.vmem [resolvable:$true] %s159
          %165 = dma.hbm_to_vmem [thread:$0]  %s158, 128, %s160, %s149, 64, 64, 4
        $region28: #{tpu_custom_call.1} parent=23 // pred_fallthru
          _
      $region24: #{tpu_custom_call.1} parent=5 // pred_fallthru
        _
      %p166 = scmp.le.s32.totalorder 1, %s16
      %p167 = scmp.lt.s32.totalorder %s16, 3
      %p168 = pnand %p166, %p167
      %p169 = pneg %p168
      // Predicated region
      $region29: #{tpu_custom_call.1} parent=5 // pred_check
        _
      $region30: #{tpu_custom_call.1} parent=5 // pred_check_branch
        %171 = sbr.rel (%p168) target = $region32
      $region31: #{tpu_custom_call.1} parent=5 // pred_region
        %s172 = ssub.s32 %s16, 1
        %s173 = sand.u32 %s29, 1
        %s174 = scalar_lea.sflag [#allocation3], %s173
        %s175 = sand.u32 %s29, 1
        %s176 = smul.addr %s175, 8
        %s177 = scalar_lea.vmem [#allocation2], %s176
        // Predicated region
        $region33: #{tpu_custom_call.1} parent=31 // pred_check
          %p178 = pneg %p42
        $region34: #{tpu_custom_call.1} parent=31 // pred_check_branch
          %180 = sbr.rel (%p178) target = $region36
        $region35: #{tpu_custom_call.1} parent=31 // pred_region
          %181 = dma.done %s174, 128
        $region36: #{tpu_custom_call.1} parent=31 // pred_fallthru
          _
        // Predicated region
        $region37: #{tpu_custom_call.1} parent=31 // pred_check
          %p182 = pneg %p63
        $region38: #{tpu_custom_call.1} parent=31 // pred_check_branch
          %184 = sbr.rel (%p182) target = $region40
        $region39: #{tpu_custom_call.1} parent=31 // pred_region
          %185 = dma.done [#allocation6], 512
        $region40: #{tpu_custom_call.1} parent=31 // pred_fallthru
          _
        %s186 = sand.u32 %s29, 1
        %s187 = scalar_lea.sflag [#allocation3], %s186
        %s188 = sand.u32 %s29, 1
        %s189 = smul.addr %s188, 8
        %s190 = scalar_lea.vmem [#allocation2], %s189
        %p191 = pneg %p42
        %p192 = pneg %p39
        %p193 = pneg %p63
        %p194 = pneg %p60
        %p195 = pneg %p84
        %p196 = pneg %p81
        %p197 = pneg %p110
        %p198 = pneg %p107
        %s199 = sand.u32 %s97, 1
        %s200 = scalar_lea.sflag [#allocation4], %s199
        %s201 = sand.u32 %s97, 1
        %s202 = smul.addr %s201, 16
        %s203 = scalar_lea.vmem [#allocation7], %s202
        %s204 = smul.u32 2, %s21
        %s205 = smul.u32 2, %s21
        %v207 = vld [vmem:[%s177] sm:$0xf]
        %v208 = vld [vmem:[%s177 + $0x4] sm:$0xf]
        %v209 = vld [vmem:[#allocation5] sm:$0xff]
        %v210 = vld [vmem:[#allocation5 + $0x8] sm:$0xff]
        %v211 = vld [vmem:[#allocation5 + $0x10] sm:$0xff]
        %v212 = vld [vmem:[#allocation5 + $0x18] sm:$0xff]
        %v213 = vld [vmem:[%s2] sm:$0x3]
        %v215 = vlaneseq
        %v216 = vshrl.u32 %v215, 7
        %v217 = vsub.s32 0, %v216
        %v218 = vrot.slane %v213, %v217
        %v219 = vlaneseq
        %v220 = vshrl.u32 %v219, 7
        %v221 = vsub.s32 1, %v220
        %v222 = vrot.slane %v213, %v221
        %v227 = vunpack.c.l.b16 %v207
        %v228 = vunpack.c.l.b16 %v208
        %v229 = vpack.c.b16 %v228, %v227
        %v234 = vunpack.c.l.b16 %v209
        %v235 = vunpack.c.h.b16 %v209
        %v236 = vunpack.c.l.b16 %v210
        %v237 = vunpack.c.h.b16 %v210
        %v238 = vunpack.c.l.b16 %v211
        %v239 = vunpack.c.h.b16 %v211
        %v240 = vunpack.c.l.b16 %v212
        %v241 = vunpack.c.h.b16 %v212
        %v242 = vpack.c.b16 %v236, %v234
        %v243 = vpack.c.b16 %v237, %v235
        %v244 = vpack.c.b16 %v240, %v238
        %v245 = vpack.c.b16 %v241, %v239
        %vm250 = vcmask 261120
        %v252 = vsel %vm250, %v229, 0
        %254 = vmatprep.subr.bf16.mxu0 %v243
        %255 = vmatpush1.bf16.msra.mxu0 %v242
        %256 = vmatprep.subr.bf16.mxu0 %v245
        %257 = vmatpush1.bf16.msra.mxu0 %v244
        %258 = vmatprep.subr.bf16.mxu0 0
        %259 = vmatpush1.bf16.msra.mxu0 0
        %260 = vmatprep.subr.bf16.mxu0 0
        %261 = vmatpush1.bf16.msra.mxu0 0
        %262 = vmatprep.subr.bf16.mxu0 0
        %263 = vmatpush1.bf16.msra.mxu0 0
        %264 = vmatprep.subr.bf16.mxu0 0
        %265 = vmatpush1.bf16.msra.mxu0 0
        %266 = vmatprep.subr.bf16.mxu0 0
        %267 = vmatpush1.bf16.msra.mxu0 0
        %268 = vmatprep.subr.bf16.mxu0 0
        %269 = vmatpush1.bf16.msra.mxu0 0
        %270 = vmatprep.subr.bf16.mxu0 0
        %271 = vmatpush1.bf16.msra.mxu0 0
        %272 = vmatprep.subr.bf16.mxu0 0
        %273 = vmatpush1.bf16.msra.mxu0 0
        %274 = vmatprep.subr.bf16.mxu0 0
        %275 = vmatpush1.bf16.msra.mxu0 0
        %276 = vmatprep.subr.bf16.mxu0 0
        %277 = vmatpush1.bf16.msra.mxu0 0
        %278 = vmatprep.subr.bf16.mxu0 0
        %279 = vmatpush1.bf16.msra.mxu0 0
        %280 = vmatprep.subr.bf16.mxu0 0
        %281 = vmatpush1.bf16.msra.mxu0 0
        %282 = vmatprep.subr.bf16.mxu0 0
        %283 = vmatpush1.bf16.msra.mxu0 0
        %284 = vmatprep.subr.bf16.mxu0 0
        %285 = vmatpush1.bf16.msra.mxu0 0
        %286 = vmatprep.mubr.bf16.mxu0 0
        %287 = vmatmul.mubr.bf16.gmra.mrb[0].mxu0 %v252
        %v288 = vpop.f32.mrb[0].mxu0
        %v289 = vadd.f32 %v218, %v288
        %v290 = vpop.f32.mrb[0].mxu0
        %v291 = vadd.f32 %v222, %v290
        %v292 = vpop.f32.mrb[0].mxu0
        %v293 = vadd.f32 %v218, %v292
        %v294 = vpop.f32.mrb[0].mxu0
        %v295 = vadd.f32 %v222, %v294
        %296 = vdwg.mxu0
        %v297 = vpack.c.bf16 %v293, %v289
        %v298 = vpack.c.bf16 %v295, %v291
        %v301 = vunpack.c.l.b16 %v297
        %v302 = vunpack.c.l.b16 %v298
        %v303 = vunpack.c.h.b16 %v297
        %v304 = vunpack.c.h.b16 %v298
        %v305 = vpack.c.b16 %v302, %v301
        %v306 = vpack.c.b16 %v304, %v303
        %309 = vst [vmem:[%s203] sm:$0xff] %v305
        %310 = vst [vmem:[%s203 + $0x8] sm:$0xff] %v306
        %s311 = sand.u32 %s97, 1
        %s312 = scalar_lea.sflag [#allocation4], %s311
        %s313 = sand.u32 %s97, 1
        %s314 = smul.addr %s313, 16
        %s315 = scalar_lea.vmem [#allocation7], %s314
        // Predicated region
        $region41: #{tpu_custom_call.1} parent=31 // pred_check
          %p316 = pneg %p107
        $region42: #{tpu_custom_call.1} parent=31 // pred_check_branch
          %318 = sbr.rel (%p316) target = $region44
        $region43: #{tpu_custom_call.1} parent=31 // pred_region
          %s319 = smul.u32 2, %s21
          %s321 = ssub.s32 256, 256
          %322 = vsyncadd %s312, %s321
          %s323 = smul.addr %s319, 2
          %s324 = smul.addr %s323, 64
          %s325 = scalar_lea.hbm %s3, %s324
          %s326 = sshll.u32 %s315, 4
          %s327 = int_to_ptr.vmem [resolvable:$true] %s326
          %332 = dma.vmem_to_hbm [thread:$0]  %s327, 256, %s325, %s312, 128, 128, 8
        $region44: #{tpu_custom_call.1} parent=31 // pred_fallthru
          _
      $region32: #{tpu_custom_call.1} parent=5 // pred_fallthru
        _
      %p333 = scmp.le.s32.totalorder 2, %s16
      // Predicated region
      $region45: #{tpu_custom_call.1} parent=5 // pred_check
        %p334 = pneg %p333
      $region46: #{tpu_custom_call.1} parent=5 // pred_check_branch
        %336 = sbr.rel (%p334) target = $region48
      $region47: #{tpu_custom_call.1} parent=5 // pred_region
        %s337 = ssub.s32 %s16, 2
        // Predicated region
        $region49: #{tpu_custom_call.1} parent=47 // pred_check
          %p338 = pneg %p113
        $region50: #{tpu_custom_call.1} parent=47 // pred_check_branch
          %340 = sbr.rel (%p338) target = $region52
        $region51: #{tpu_custom_call.1} parent=47 // pred_region
          %s341 = sand.u32 %s98, 1
          %s342 = scalar_lea.sflag [#allocation4], %s341
          %s343 = sand.u32 %s98, 1
          %s344 = smul.addr %s343, 16
          %s345 = scalar_lea.vmem [#allocation7], %s344
          %346 = dma.done %s342, 256
        $region52: #{tpu_custom_call.1} parent=47 // pred_fallthru
          _
      $region48: #{tpu_custom_call.1} parent=5 // pred_fallthru
        _
    $region6: #{tpu_custom_call.1} parent=1 // loop_footer
      %s20 = sadd.s32 1, %s16
    $region7: #{tpu_custom_call.1} parent=1 // loop_footer_branch
      %15 = sbr.rel target = $region3
    $region8: #{tpu_custom_call.1} parent=1 // loop_exit
      _
    %347 = vsyncpa [#allocation3], 1
    %s348 = scalar_lea.sflag [#allocation3], 1
    %349 = vsyncpa %s348, 1
    %350 = vsyncpa [#allocation6], 1
    %351 = vsyncpa [#allocation4], 1
    %s352 = scalar_lea.sflag [#allocation4], 1
    %353 = vsyncpa %s352, 1

</llo_original>
